<compile_context>
chip_gen: v7x
topology: tpu7x:2x2x1
jax: 0.10.0
libtpu: 0.0.40
codegen_flags: <defaults>
</compile_context>

<pallas_src>
import functools

import jax
import jax.numpy as jnp
from jax.experimental import pallas as pl
from jax.experimental.pallas import tpu as pltpu


def _round_up(x, m):
    return (x + m - 1) // m * m


def _choose_tile(extent, max_tile, multiple):
    """Pick a tile size (multiple of `multiple`, <= max_tile-ish) that minimizes
    padding waste; prefer larger tiles on ties (fewer grid steps)."""
    max_tile = max(multiple, _round_up(max_tile, multiple))
    cands = {min(max_tile, _round_up(extent, multiple))}
    for c in (128, 256, 512, 1024):
        if multiple <= c <= max_tile:
            cands.add(c)
    return min(cands, key=lambda t: (_round_up(extent, t) - extent, -t))


def _vmem_limit_bytes():
    # ~75% of per-core VMEM, capped at 96 MiB (v5e/v6e: 128 MiB -> 96 MiB,
    # v7x: 64 MiB -> 48 MiB).  Fallback is safe on every generation.
    try:
        cap = pltpu.get_tpu_info().vmem_capacity_bytes
        return int(min(cap * 3 // 4, 96 * 1024 * 1024))
    except Exception:
        return 48 * 1024 * 1024


def _sigmoid_eup(g):
    # sigmoid(g) == 0.5*(tanh(0.5*g)+1): keeps the transcendental on the EUP
    # slot (free under MXU work) and avoids a VPU divide over the whole tile.
    return 0.5 * (jnp.tanh(0.5 * g) + 1.0)


# ---------------------------------------------------------------------------
# Kernels
# ---------------------------------------------------------------------------

def _gated_linear_resident_kernel(x_ref, w_ref, b_ref, o_ref, *, fout_pad):
    """Whole packed weight resident in VMEM; no K loop, no accumulator RMW."""
    acc = jnp.dot(x_ref[...], w_ref[...], preferred_element_type=jnp.float32)
    acc = acc + b_ref[...]                      # bias kept in f32
    lin = acc[:, :fout_pad]
    gate = acc[:, fout_pad:]
    o_ref[...] = (lin * _sigmoid_eup(gate)).astype(o_ref.dtype)


def _gated_linear_streaming_kernel(x_ref, w_ref, b_ref, o_ref, acc_ref, *, tn):
    """(M, N, K) grid with f32 VMEM accumulator carried over the K axis."""
    k = pl.program_id(2)

    @pl.when(k == 0)
    def _():
        acc_ref[...] = jnp.zeros_like(acc_ref)

    # One fused MXU matmul per step: (TM, TK) @ (TK, 2*TN) -> (TM, 2*TN) f32.
    acc_ref[...] += jnp.dot(x_ref[...], w_ref[...],
                            preferred_element_type=jnp.float32)

    @pl.when(k == pl.num_programs(2) - 1)
    def _():
        acc = acc_ref[...] + b_ref[...]
        lin = acc[:, :tn]
        gate = acc[:, tn:]
        o_ref[...] = (lin * _sigmoid_eup(gate)).astype(o_ref.dtype)


# ---------------------------------------------------------------------------
# Parameter packing (done once, ahead of time)
# ---------------------------------------------------------------------------

def _pack_params(w_lin, b_lin, w_gate, b_gate, *, tn, fin_pad, fout_pad,
                 compute_dtype):
    """Transpose, pad and block-interleave [Wl_blk_j | Wg_blk_j | ...] so each
    grid step does ONE contiguous weight DMA and ONE MXU matmul."""
    fout, fin = w_lin.shape
    nblk = fout_pad // tn

    def pad_t(w):  # (Fout, Fin) -> (Fin_pad, Fout_pad)
        w = jnp.pad(w, ((0, fout_pad - fout), (0, fin_pad - fin)))
        return w.T

    wl = pad_t(w_lin).reshape(fin_pad, nblk, 1, tn)
    wg = pad_t(w_gate).reshape(fin_pad, nblk, 1, tn)
    w_packed = jnp.concatenate([wl, wg], axis=2).reshape(fin_pad, nblk * 2 * tn)
    w_packed = w_packed.astype(compute_dtype)       # bf16 for the MXU

    def pad_b(b):
        return jnp.pad(b, (0, fout_pad - fout)).reshape(nblk, 1, tn)

    b_packed = jnp.concatenate([pad_b(b_lin), pad_b(b_gate)], axis=2)
    b_packed = b_packed.reshape(1, nblk * 2 * tn).astype(jnp.float32)  # f32 bias
    return w_packed, b_packed


# ---------------------------------------------------------------------------
# Builder
# ---------------------------------------------------------------------------

def make_gated_linear(w_lin, b_lin, w_gate, b_gate, *,
                      tile_m=256, tile_n=512, tile_k=1024,
                      compute_dtype=jnp.bfloat16,
                      max_resident_weight_bytes=8 * 1024 * 1024):
    """Build GatedLinear apply(x).  w_*: (Fout, Fin) PyTorch-style; b_*: (Fout,)."""
    fout, fin = w_lin.shape
    itemsize = jnp.dtype(compute_dtype).itemsize
    sub = 32 // itemsize                     # sublane multiple: f32->8, bf16->16

    fin_pad_min = _round_up(fin, 128)
    fout_pad_min = _round_up(fout, 128)
    packed_bytes = fin_pad_min * 2 * fout_pad_min * itemsize
    resident = packed_bytes <= max_resident_weight_bytes

    if resident:
        # Whole packed weight lives in VMEM; single N block, no K grid axis.
        tn, tk = fout_pad_min, fin_pad_min
        fout_pad, fin_pad = fout_pad_min, fin_pad_min
    else:
        tn = _choose_tile(fout, tile_n, 128)   # lane-dense output tiles
        tk = _choose_tile(fin, tile_k, 128)
        fout_pad = _round_up(fout, tn)
        fin_pad = _round_up(fin, tk)

    w_packed, b_packed = _pack_params(
        w_lin, b_lin, w_gate, b_gate,
        tn=tn, fin_pad=fin_pad, fout_pad=fout_pad, compute_dtype=compute_dtype)

    vmem_limit = _vmem_limit_bytes()
    out_itemsize = 4  # outputs kept in the input dtype (f32 in the tests)

    def apply(x):
        batch = x.shape[0]
        tm = _choose_tile(batch, tile_m, sub)
        b_pad = _round_up(batch, tm)
        grid_m = b_pad // tm

        x_p = x.astype(compute_dtype)
        if (b_pad != batch) or (fin_pad != fin):
            x_p = jnp.pad(x_p, ((0, b_pad - batch), (0, fin_pad - fin)))

        if resident:
            kernel = functools.partial(_gated_linear_resident_kernel,
                                       fout_pad=fout_pad)
            grid = (grid_m,)
            in_specs = [
                pl.BlockSpec((tm, fin_pad), lambda i: (i, 0)),
                # Constant block index -> DMA'd exactly once, stays resident.
                pl.BlockSpec((fin_pad, 2 * fout_pad), lambda i: (0, 0)),
                pl.BlockSpec((1, 2 * fout_pad), lambda i: (0, 0)),
            ]
            out_specs = pl.BlockSpec((tm, fout_pad), lambda i: (i, 0))
            scratch_shapes = ()
            dim_sem = ("parallel",)
            weight_streams = 1
        else:
            kernel = functools.partial(_gated_linear_streaming_kernel, tn=tn)
            grid = (grid_m, fout_pad // tn, fin_pad // tk)
            in_specs = [
                pl.BlockSpec((tm, tk), lambda i, j, k: (i, k)),
                pl.BlockSpec((tk, 2 * tn), lambda i, j, k: (k, j)),
                pl.BlockSpec((1, 2 * tn), lambda i, j, k: (0, j)),
            ]
            out_specs = pl.BlockSpec((tm, tn), lambda i, j, k: (i, j))
            scratch_shapes = (pltpu.VMEM((tm, 2 * tn), jnp.float32),)
            dim_sem = ("parallel", "parallel", "arbitrary")
            weight_streams = grid_m  # weights re-streamed per M tile

        cost = pl.CostEstimate(
            flops=4 * b_pad * fin_pad * fout_pad,       # two matmuls fused
            transcendentals=b_pad * fout_pad,           # tanh-based sigmoid
            bytes_accessed=(b_pad * fin_pad * itemsize
                            + int(w_packed.size) * itemsize * weight_streams
                            + int(b_packed.size) * 4
                            + b_pad * fout_pad * out_itemsize),
        )

        out = pl.pallas_call(
            kernel,
            out_shape=jax.ShapeDtypeStruct((b_pad, fout_pad), x.dtype),
            grid_spec=pltpu.PrefetchScalarGridSpec(
                num_scalar_prefetch=0,
                grid=grid,
                in_specs=in_specs,
                out_specs=out_specs,
                scratch_shapes=scratch_shapes,
            ),
            compiler_params=pltpu.CompilerParams(
                dimension_semantics=dim_sem,
                vmem_limit_bytes=vmem_limit,
            ),
            cost_estimate=cost,
        )(x_p, w_packed, b_packed)

        if (b_pad != batch) or (fout_pad != fout):
            out = out[:batch, :fout]
        return out

    return apply


def init_gated_linear_params(key, in_features, out_features, dtype=jnp.float32):
    """Deterministic init mimicking torch.nn.Linear default (uniform +/-1/sqrt(fan_in))."""
    k1, k2, k3, k4 = jax.random.split(key, 4)
    bound = 1.0 / (in_features ** 0.5)
    w_lin = jax.random.uniform(k1, (out_features, in_features), dtype, -bound, bound)
    b_lin = jax.random.uniform(k2, (out_features,), dtype, -bound, bound)
    w_gate = jax.random.uniform(k3, (out_features, in_features), dtype, -bound, bound)
    b_gate = jax.random.uniform(k4, (out_features,), dtype, -bound, bound)
    return w_lin, b_lin, w_gate, b_gate


if __name__ == "__main__":
    key = jax.random.PRNGKey(0)
    kx, kp, kx2, kp2 = jax.random.split(key, 4)

    # --- Typical small GatedLinear: weight-resident, bf16 MXU path. ---------
    batch, in_features, out_features = 8, 32, 16
    x = jax.random.normal(kx, (batch, in_features), jnp.float32)
    w_lin, b_lin, w_gate, b_gate = init_gated_linear_params(
        kp, in_features, out_features)

    gated_linear = make_gated_linear(w_lin, b_lin, w_gate, b_gate)
    out = jax.block_until_ready(gated_linear(x))

    ref = (x @ w_lin.T + b_lin) * jax.nn.sigmoid(x @ w_gate.T + b_gate)
    assert out.shape == (batch, out_features)
    assert jnp.allclose(out, ref, atol=3e-2, rtol=3e-2), \
        float(jnp.max(jnp.abs(out - ref)))

    # --- Larger layer forced onto the streaming (M, N, K) path, f32 compute.
    batch2, in2, out2 = 40, 384, 256
    x2 = jax.random.normal(kx2, (batch2, in2), jnp.float32)
    p2 = init_gated_linear_params(kp2, in2, out2)

    gated_linear2 = make_gated_linear(
        *p2, tile_m=256, tile_n=128, tile_k=128,
        compute_dtype=jnp.float32, max_resident_weight_bytes=0)
    out2_v = jax.block_until_ready(gated_linear2(x2))

    ref2 = (x2 @ p2[0].T + p2[1]) * jax.nn.sigmoid(x2 @ p2[2].T + p2[3])
    assert out2_v.shape == (batch2, out2)
    # Tolerance covers TPU default matmul precision in the pure-JAX reference.
    assert jnp.allclose(out2_v, ref2, atol=2e-2, rtol=2e-2), \
        float(jnp.max(jnp.abs(out2_v - ref2)))

    print("KERNEL_OK")
</pallas_src>

<mosaic_0001>
module attributes {stable_mosaic.version = 11 : i64} {
  func.func @_gated_linear_resident_kernel(%arg0: i32, %arg1: memref<16x128xbf16, #tpu.memory_space<vmem>>, %arg2: memref<128x256xbf16, #tpu.memory_space<vmem>>, %arg3: memref<1x256xf32, #tpu.memory_space<vmem>>, %arg4: memref<16x128xf32, #tpu.memory_space<vmem>>) attributes {dimension_semantics = [#tpu.dimension_semantics<parallel>], iteration_bounds = array<i64: 1>, scalar_prefetch = 0 : i64, scratch_operands = 0 : i64, tpu.core_type = #tpu.core_type<tc>, window_params = [{transform_indices = @transform_0, window_bounds = array<i64: 16, 128>}, {pipeline_mode = #tpu.pipeline_mode<synchronous>, transform_indices = @transform_1, window_bounds = array<i64: 128, 256>}, {pipeline_mode = #tpu.pipeline_mode<synchronous>, transform_indices = @transform_2, window_bounds = array<i64: 1, 256>}, {transform_indices = @transform_3, window_bounds = array<i64: 16, 128>}]} {
    %c0 = arith.constant 0 : index
    %c0_0 = arith.constant 0 : index
    %0 = vector.load %arg1[%c0, %c0_0] : memref<16x128xbf16, #tpu.memory_space<vmem>>, vector<16x128xbf16>
    %c0_1 = arith.constant 0 : index
    %c0_2 = arith.constant 0 : index
    %1 = vector.load %arg2[%c0_1, %c0_2] : memref<128x256xbf16, #tpu.memory_space<vmem>>, vector<128x256xbf16>
    %cst = arith.constant dense<0.000000e+00> : vector<16x256xf32>
    %2 = tpu.matmul %0, %1, %cst {dimension_numbers = #tpu.dot_dimension_numbers<[1], [0], [0], [1], [0, 0, 1, 1], [], []>} : vector<16x128xbf16>, vector<128x256xbf16>, vector<16x256xf32> -> vector<16x256xf32>
    %c0_3 = arith.constant 0 : index
    %c0_4 = arith.constant 0 : index
    %3 = vector.load %arg3[%c0_3, %c0_4] : memref<1x256xf32, #tpu.memory_space<vmem>>, vector<1x256xf32>
    %4 = vector.broadcast %3 : vector<1x256xf32> to vector<16x256xf32>
    %5 = arith.addf %2, %4 : vector<16x256xf32>
    %6 = vector.extract_strided_slice %5 {offsets = [0, 0], sizes = [16, 128], strides = [1, 1]} : vector<16x256xf32> to vector<16x128xf32>
    %7 = vector.extract_strided_slice %5 {offsets = [0, 128], sizes = [16, 128], strides = [1, 1]} : vector<16x256xf32> to vector<16x128xf32>
    %cst_5 = arith.constant 5.000000e-01 : f32
    %8 = vector.broadcast %cst_5 : f32 to vector<16x128xf32>
    %9 = arith.mulf %8, %7 : vector<16x128xf32>
    %10 = math.tanh %9 : vector<16x128xf32>
    %cst_6 = arith.constant 1.000000e+00 : f32
    %11 = vector.broadcast %cst_6 : f32 to vector<16x128xf32>
    %12 = arith.addf %10, %11 : vector<16x128xf32>
    %cst_7 = arith.constant 5.000000e-01 : f32
    %13 = vector.broadcast %cst_7 : f32 to vector<16x128xf32>
    %14 = arith.mulf %13, %12 : vector<16x128xf32>
    %15 = arith.mulf %6, %14 : vector<16x128xf32>
    %c0_8 = arith.constant 0 : index
    %c0_9 = arith.constant 0 : index
    %16 = vector.load %arg4[%c0_8, %c0_9] : memref<16x128xf32, #tpu.memory_space<vmem>>, vector<16x128xf32>
    tpu.vector_store %arg4[%c0_8, %c0_9], %15 {strides = array<i32>} : memref<16x128xf32, #tpu.memory_space<vmem>>, vector<16x128xf32>,
    return
  }
  func.func @transform_0(%arg0: i32) -> (i32, i32) {
    %c0_i32 = arith.constant 0 : i32
    %c0_i32_0 = arith.constant 0 : i32
    return %arg0, %c0_i32 : i32, i32
  }
  func.func @transform_1(%arg0: i32) -> (i32, i32) {
    %c0_i32 = arith.constant 0 : i32
    %c0_i32_0 = arith.constant 0 : i32
    %c0_i32_1 = arith.constant 0 : i32
    return %c0_i32, %c0_i32_0 : i32, i32
  }
  func.func @transform_2(%arg0: i32) -> (i32, i32) {
    %c0_i32 = arith.constant 0 : i32
    %c0_i32_0 = arith.constant 0 : i32
    %c0_i32_1 = arith.constant 0 : i32
    return %c0_i32, %c0_i32_0 : i32, i32
  }
  func.func @transform_3(%arg0: i32) -> (i32, i32) {
    %c0_i32 = arith.constant 0 : i32
    %c0_i32_0 = arith.constant 0 : i32
    return %arg0, %c0_i32 : i32, i32
  }
}

</mosaic_0001>

<llo_original>
// kernel: tpu_custom_call.1
$region0: #{tpu_custom_call.1}
  #allocation0 [shape = 'u32[]', space=smem, size = 0x4, offset = 0x4, fixed_abs, tag = 'smem constant byte address 0x4 - core index']
  #allocation1 [shape = 'u32[144,128]{1,0:T(1,128)}', space=vmem, size = 0x12000, scoped, tag = 'internal scratch']
  %s0 = inlined_call_operand.hbm [shape: bf16[16,128], index: 0, kind: input, shape index: {}]
  %s1 = inlined_call_operand.hbm [shape: bf16[128,256], index: 1, kind: input, shape index: {}]
  %s2 = inlined_call_operand.vmem [shape: f32[1,256], index: 2, kind: input, shape index: {}]
  %s3 = inlined_call_operand.hbm [shape: f32[16,128], index: 3, kind: output, shape index: {}]
  %s4 = sld [smem:[#allocation0]]
  $region30: #{tpu_custom_call.1} parent=0
    _
  %s6 = ssub.s32 1, %s4
  %s7 = scalar_select 0, %s6, %s4
  $region1: #{tpu_custom_call.1} parent=0
    #allocation2 [shape = 'u8[4096]{0}', space=vmem, size = 0x1000, scoped, tag = 'input window, operand 0, single buffered']
    #allocation3 [shape = 's32[1]{0}', space=sflag, size = 0x4, scoped, tag = 'scoped memory for tpu_custom_call.1']
    #allocation4 [shape = 's32[1]{0}', space=sflag, size = 0x4, scoped, tag = 'scoped memory for tpu_custom_call.1']
    #allocation5 [shape = 'u8[65536]{0}', space=vmem, size = 0x10000, scoped, tag = 'input window, operand 1, single buffered']
    #allocation6 [shape = 's32[1]{0}', space=sflag, size = 0x4, scoped, tag = 'scoped memory for tpu_custom_call.1']
    #allocation7 [shape = 'u8[8192]{0}', space=vmem, size = 0x2000, scoped, tag = 'output window, operand 0, single buffered']
    %8 = vsyncpa [#allocation3], 0
    %9 = vsyncpa [#allocation6], 0
    %10 = vsyncpa [#allocation4], 0
    // Predicated region
    $region2: #{tpu_custom_call.1} parent=1 // pred_check
      _
    $region3: #{tpu_custom_call.1} parent=1 // pred_check_branch
      %12 = sbr.rel (0) target = $region5
    $region4: #{tpu_custom_call.1} parent=1 // pred_region
      %s14 = ssub.s32 128, 128
      %15 = vsyncadd [#allocation3], %s14
      %s16 = sshll.u32 [#allocation2], 4
      %s17 = int_to_ptr.vmem [resolvable:$true] %s16
      %22 = dma.hbm_to_vmem [thread:$0]  %s0, 128, %s17, [#allocation3], 64, 64, 4
    $region5: #{tpu_custom_call.1} parent=1 // pred_fallthru
      _
    // Predicated region
    $region6: #{tpu_custom_call.1} parent=1 // pred_check
      _
    $region7: #{tpu_custom_call.1} parent=1 // pred_check_branch
      %24 = sbr.rel (0) target = $region9
    $region8: #{tpu_custom_call.1} parent=1 // pred_region
      %s26 = ssub.s32 2048, 2048
      %27 = vsyncadd [#allocation6], %s26
      %s28 = sshll.u32 [#allocation5], 4
      %s29 = int_to_ptr.vmem [resolvable:$true] %s28
      %34 = dma.hbm_to_vmem [thread:$0]  %s1, 2048, %s29, [#allocation6], 128, 128, 8
    $region9: #{tpu_custom_call.1} parent=1 // pred_fallthru
      _
    // Predicated region
    $region10: #{tpu_custom_call.1} parent=1 // pred_check
      _
    $region11: #{tpu_custom_call.1} parent=1 // pred_check_branch
      %36 = sbr.rel (0) target = $region13
    $region12: #{tpu_custom_call.1} parent=1 // pred_region
      _
    $region13: #{tpu_custom_call.1} parent=1 // pred_fallthru
      _
    // Predicated region
    $region14: #{tpu_custom_call.1} parent=1 // pred_check
      _
    $region15: #{tpu_custom_call.1} parent=1 // pred_check_branch
      %38 = sbr.rel (0) target = $region17
    $region16: #{tpu_custom_call.1} parent=1 // pred_region
      %39 = dma.done [#allocation3], 128
    $region17: #{tpu_custom_call.1} parent=1 // pred_fallthru
      _
    // Predicated region
    $region18: #{tpu_custom_call.1} parent=1 // pred_check
      _
    $region19: #{tpu_custom_call.1} parent=1 // pred_check_branch
      %41 = sbr.rel (0) target = $region21
    $region20: #{tpu_custom_call.1} parent=1 // pred_region
      %42 = dma.done [#allocation6], 2048
    $region21: #{tpu_custom_call.1} parent=1 // pred_fallthru
      _
    %v44 = vld [vmem:[#allocation2] sm:$0xf]
    %v45 = vld [vmem:[#allocation2 + $0x4] sm:$0xf]
    %v46 = vld [vmem:[#allocation5] sm:$0xff]
    %v47 = vld [vmem:[#allocation5 + $0x8] sm:$0xff]
    %v48 = vld [vmem:[#allocation5 + $0x10] sm:$0xff]
    %v49 = vld [vmem:[#allocation5 + $0x18] sm:$0xff]
    %v50 = vld [vmem:[#allocation5 + $0x20] sm:$0xff]
    %v51 = vld [vmem:[#allocation5 + $0x28] sm:$0xff]
    %v52 = vld [vmem:[#allocation5 + $0x30] sm:$0xff]
    %v53 = vld [vmem:[#allocation5 + $0x38] sm:$0xff]
    %v54 = vld [vmem:[#allocation5 + $0x40] sm:$0xff]
    %v55 = vld [vmem:[#allocation5 + $0x48] sm:$0xff]
    %v56 = vld [vmem:[#allocation5 + $0x50] sm:$0xff]
    %v57 = vld [vmem:[#allocation5 + $0x58] sm:$0xff]
    %v58 = vld [vmem:[#allocation5 + $0x60] sm:$0xff]
    %v59 = vld [vmem:[#allocation5 + $0x68] sm:$0xff]
    %v60 = vld [vmem:[#allocation5 + $0x70] sm:$0xff]
    %v61 = vld [vmem:[#allocation5 + $0x78] sm:$0xff]
    %v62 = vld [vmem:[%s2] sm:$0x3]
    %v64 = vlaneseq
    %v65 = vshrl.u32 %v64, 7
    %v66 = vsub.s32 0, %v65
    %v67 = vrot.slane %v62, %v66
    %v68 = vlaneseq
    %v69 = vshrl.u32 %v68, 7
    %v70 = vsub.s32 1, %v69
    %v71 = vrot.slane %v62, %v70
    %v76 = vunpack.c.l.b16 %v44
    %v77 = vunpack.c.l.b16 %v45
    %v78 = vpack.c.b16 %v77, %v76
    %v96 = vunpack.c.l.b16 %v46
    %v97 = vunpack.c.h.b16 %v46
    %v98 = vunpack.c.l.b16 %v47
    %v99 = vunpack.c.h.b16 %v47
    %v100 = vunpack.c.l.b16 %v48
    %v101 = vunpack.c.h.b16 %v48
    %v102 = vunpack.c.l.b16 %v49
    %v103 = vunpack.c.h.b16 %v49
    %v104 = vunpack.c.l.b16 %v50
    %v105 = vunpack.c.h.b16 %v50
    %v106 = vunpack.c.l.b16 %v51
    %v107 = vunpack.c.h.b16 %v51
    %v108 = vunpack.c.l.b16 %v52
    %v109 = vunpack.c.h.b16 %v52
    %v110 = vunpack.c.l.b16 %v53
    %v111 = vunpack.c.h.b16 %v53
    %v112 = vunpack.c.l.b16 %v54
    %v113 = vunpack.c.h.b16 %v54
    %v114 = vunpack.c.l.b16 %v55
    %v115 = vunpack.c.h.b16 %v55
    %v116 = vunpack.c.l.b16 %v56
    %v117 = vunpack.c.h.b16 %v56
    %v118 = vunpack.c.l.b16 %v57
    %v119 = vunpack.c.h.b16 %v57
    %v120 = vunpack.c.l.b16 %v58
    %v121 = vunpack.c.h.b16 %v58
    %v122 = vunpack.c.l.b16 %v59
    %v123 = vunpack.c.h.b16 %v59
    %v124 = vunpack.c.l.b16 %v60
    %v125 = vunpack.c.h.b16 %v60
    %v126 = vunpack.c.l.b16 %v61
    %v127 = vunpack.c.h.b16 %v61
    %v128 = vpack.c.b16 %v98, %v96
    %v129 = vpack.c.b16 %v99, %v97
    %v130 = vpack.c.b16 %v102, %v100
    %v131 = vpack.c.b16 %v103, %v101
    %v132 = vpack.c.b16 %v106, %v104
    %v133 = vpack.c.b16 %v107, %v105
    %v134 = vpack.c.b16 %v110, %v108
    %v135 = vpack.c.b16 %v111, %v109
    %v136 = vpack.c.b16 %v114, %v112
    %v137 = vpack.c.b16 %v115, %v113
    %v138 = vpack.c.b16 %v118, %v116
    %v139 = vpack.c.b16 %v119, %v117
    %v140 = vpack.c.b16 %v122, %v120
    %v141 = vpack.c.b16 %v123, %v121
    %v142 = vpack.c.b16 %v126, %v124
    %v143 = vpack.c.b16 %v127, %v125
    %160 = vmatprep.subr.bf16.mxu0 %v129
    %161 = vmatpush1.bf16.msra.mxu0 %v128
    %162 = vmatprep.subr.bf16.mxu0 %v131
    %163 = vmatpush1.bf16.msra.mxu0 %v130
    %164 = vmatprep.subr.bf16.mxu0 %v133
    %165 = vmatpush1.bf16.msra.mxu0 %v132
    %166 = vmatprep.subr.bf16.mxu0 %v135
    %167 = vmatpush1.bf16.msra.mxu0 %v134
    %168 = vmatprep.subr.bf16.mxu0 %v137
    %169 = vmatpush1.bf16.msra.mxu0 %v136
    %170 = vmatprep.subr.bf16.mxu0 %v139
    %171 = vmatpush1.bf16.msra.mxu0 %v138
    %172 = vmatprep.subr.bf16.mxu0 %v141
    %173 = vmatpush1.bf16.msra.mxu0 %v140
    %174 = vmatprep.subr.bf16.mxu0 %v143
    %175 = vmatpush1.bf16.msra.mxu0 %v142
    %176 = vmatprep.subr.bf16.mxu0 0
    %177 = vmatpush1.bf16.msra.mxu0 0
    %178 = vmatprep.subr.bf16.mxu0 0
    %179 = vmatpush1.bf16.msra.mxu0 0
    %180 = vmatprep.subr.bf16.mxu0 0
    %181 = vmatpush1.bf16.msra.mxu0 0
    %182 = vmatprep.subr.bf16.mxu0 0
    %183 = vmatpush1.bf16.msra.mxu0 0
    %184 = vmatprep.subr.bf16.mxu0 0
    %185 = vmatpush1.bf16.msra.mxu0 0
    %186 = vmatprep.subr.bf16.mxu0 0
    %187 = vmatpush1.bf16.msra.mxu0 0
    %188 = vmatprep.subr.bf16.mxu0 0
    %189 = vmatpush1.bf16.msra.mxu0 0
    %190 = vmatprep.subr.bf16.mxu0 0
    %191 = vmatpush1.bf16.msra.mxu0 0
    %192 = vmatprep.mubr.bf16.mxu0 0
    %193 = vmatmul.mubr.bf16.gmra.mrb[0].mxu0 %v78
    %v194 = vpop.f32.mrb[0].mxu0
    %v195 = vadd.f32 %v67, %v194
    %v196 = vpop.f32.mrb[0].mxu0
    %v197 = vadd.f32 %v71, %v196
    %v198 = vpop.f32.mrb[0].mxu0
    %v199 = vadd.f32 %v67, %v198
    %v200 = vpop.f32.mrb[0].mxu0
    %v201 = vadd.f32 %v71, %v200
    %202 = vdwg.mxu0
    %v203 = vmul.f32 %v197, 0.5
    %v204 = vmul.f32 %v201, 0.5
    %v205 = vtanh.pop %v203
    %v206 = vtanh.pop %v204
    %v207 = vadd.f32 %v205, 1.0
    %v208 = vadd.f32 %v206, 1.0
    %v209 = vmul.f32 %v207, 0.5
    %v210 = vmul.f32 %v208, 0.5
    %v211 = vmul.f32 %v195, %v209
    %v212 = vmul.f32 %v199, %v210
    %213 = vst [vmem:[#allocation7] sm:$0xff] %v211
    %214 = vst [vmem:[#allocation7 + $0x8] sm:$0xff] %v212
    // Predicated region
    $region22: #{tpu_custom_call.1} parent=1 // pred_check
      _
    $region23: #{tpu_custom_call.1} parent=1 // pred_check_branch
      %216 = sbr.rel (0) target = $region25
    $region24: #{tpu_custom_call.1} parent=1 // pred_region
      %s218 = ssub.s32 256, 256
      %219 = vsyncadd [#allocation4], %s218
      %s220 = sshll.u32 [#allocation7], 4
      %s221 = int_to_ptr.vmem [resolvable:$true] %s220
      %226 = dma.vmem_to_hbm [thread:$0]  %s221, 256, %s3, [#allocation4], 128, 128, 8
    $region25: #{tpu_custom_call.1} parent=1 // pred_fallthru
      _
    // Predicated region
    $region26: #{tpu_custom_call.1} parent=1 // pred_check
      _
    $region27: #{tpu_custom_call.1} parent=1 // pred_check_branch
      %228 = sbr.rel (0) target = $region29
    $region28: #{tpu_custom_call.1} parent=1 // pred_region
      %229 = dma.done [#allocation4], 256
    $region29: #{tpu_custom_call.1} parent=1 // pred_fallthru
      _
    %230 = vsyncpa [#allocation3], 1
    %231 = vsyncpa [#allocation6], 1
    %232 = vsyncpa [#allocation4], 1

</llo_original>
